<compile_context>
chip_gen: v6e
topology: v6e:2x2x1
jax: 0.10.0
libtpu: 0.0.40
codegen_flags: <defaults>
</compile_context>

<pallas_src>
import functools

import jax
import jax.numpy as jnp
from jax.experimental import pallas as pl
from jax.experimental.pallas import tpu as pltpu

# --------------------- small shapes consistent with the module ---------------------
B = 2            # batch
EMB = 128        # embed_dim (constructor arg; 128 keeps lanes dense on TPU)
H = 16           # patches_resolution[0]
W = 16           # patches_resolution[1]
HW = H * W       # num_patches tokens produced by flatten(2)
LN_EPS = 1e-5    # nn.LayerNorm default eps


# ------------------------------------ kernels ---------------------------------------
def patch_embed_norm_kernel(x_ref, g_ref, b_ref, o_ref):
    """flatten + transpose + LayerNorm(embed_dim) for a (B, C, T) token tile.

    Stats are computed in the (C, T) layout (channels on sublanes), so the only
    XLU work is the single data transpose per batch item.
    """
    g = g_ref[...]                          # (C, 1) -> broadcasts along lanes
    bta = b_ref[...]                        # (C, 1)
    nb, c, _ = x_ref.shape
    inv_c = 1.0 / c
    for bi in range(nb):                    # B is tiny and static
        x = x_ref[bi]                                           # (C, T)
        mu = jnp.sum(x, axis=0, keepdims=True) * inv_c          # (1, T)
        xc = x - mu
        var = jnp.sum(xc * xc, axis=0, keepdims=True) * inv_c   # (1, T) biased var
        y = xc * jax.lax.rsqrt(var + LN_EPS) * g + bta          # (C, T)
        o_ref[bi] = y.T                                         # (T, C) one XLU transpose


def patch_embed_kernel(x_ref, o_ref):
    """flatten + transpose only (norm_layer=None path)."""
    nb = x_ref.shape[0]
    for bi in range(nb):
        o_ref[bi] = x_ref[bi].T


# ------------------------------- pallas_call wrapper --------------------------------
def patch_embed_forward(x, gamma=None, beta=None, *, use_norm=True, token_splits=2):
    """x: (B, C, H, W) float32 -> (B, H*W, C), matching PatchEmbed.forward."""
    b, c, h, w = x.shape
    hw = h * w
    # Wrapper-side reshape keeps lanes dense (last dim = HW, not W=16); this is a
    # free metadata change in XLA.
    xr = x.reshape(b, c, hw)

    # Token-axis split: >=2 entries keeps both v7x TensorCores busy; tiles stay
    # multiples of 128 lanes. Fall back to a single step if it does not divide.
    if hw % token_splits != 0 or (hw // token_splits) % 128 != 0:
        token_splits = 1
    t = hw // token_splits

    # Bandwidth-dominated cost hint (2x traffic for read + write of x).
    itemsize = jnp.dtype(x.dtype).itemsize
    cost = pl.CostEstimate(
        flops=(b * hw * c * 8) if use_norm else 0,
        transcendentals=(b * hw) if use_norm else 0,
        bytes_accessed=2 * b * c * hw * itemsize,
    )

    out_shape = jax.ShapeDtypeStruct((b, hw, c), x.dtype)
    out_spec = pl.BlockSpec((b, t, c), lambda i: (0, i, 0))
    cparams = pltpu.CompilerParams(dimension_semantics=("parallel",))

    if use_norm:
        assert gamma is not None and beta is not None
        g_col = gamma.reshape(c, 1)          # (C, 1): lane-broadcast in (C, T) layout
        b_col = beta.reshape(c, 1)
        return pl.pallas_call(
            patch_embed_norm_kernel,
            out_shape=out_shape,
            grid=(token_splits,),
            in_specs=[pl.BlockSpec((b, c, t), lambda i: (0, 0, i)),   # x token tile
                      pl.BlockSpec((c, 1), lambda i: (0, 0)),          # LN gamma
                      pl.BlockSpec((c, 1), lambda i: (0, 0))],         # LN beta
            out_specs=out_spec,
            compiler_params=cparams,
            cost_estimate=cost,
        )(xr, g_col, b_col)

    # norm_layer=None: no gamma/beta DMAs at all.
    return pl.pallas_call(
        patch_embed_kernel,
        out_shape=out_shape,
        grid=(token_splits,),
        in_specs=[pl.BlockSpec((b, c, t), lambda i: (0, 0, i))],
        out_specs=out_spec,
        compiler_params=cparams,
        cost_estimate=cost,
    )(xr)


# ---------------------------- pure-JAX reference (check) ----------------------------
def reference(x, gamma, beta, *, use_norm=True):
    b, c, h, w = x.shape
    y = jnp.transpose(x.reshape(b, c, h * w), (0, 2, 1))             # (B, HW, C)
    if use_norm:
        mu = jnp.mean(y, axis=-1, keepdims=True)
        var = jnp.mean((y - mu) ** 2, axis=-1, keepdims=True)
        y = (y - mu) * jax.lax.rsqrt(var + LN_EPS) * gamma + beta
    return y


# -------------------------------------- main ----------------------------------------
if __name__ == "__main__":
    key = jax.random.PRNGKey(0)
    kx, kg, kb = jax.random.split(key, 3)
    x = jax.random.normal(kx, (B, EMB, H, W), jnp.float32)
    gamma = 1.0 + 0.1 * jax.random.normal(kg, (EMB,), jnp.float32)
    beta = 0.1 * jax.random.normal(kb, (EMB,), jnp.float32)

    # norm_layer = nn.LayerNorm path
    fwd = jax.jit(functools.partial(patch_embed_forward, use_norm=True))
    out = jax.block_until_ready(fwd(x, gamma, beta))
    assert out.shape == (B, HW, EMB), out.shape
    ref = reference(x, gamma, beta, use_norm=True)
    assert bool(jnp.all(jnp.isfinite(out)))
    assert bool(jnp.allclose(out, ref, atol=1e-5, rtol=1e-5)), \
        float(jnp.max(jnp.abs(out - ref)))

    # norm_layer = None path (pure flatten + transpose, no gamma/beta inputs)
    fwd_nonorm = jax.jit(functools.partial(patch_embed_forward, use_norm=False))
    out2 = jax.block_until_ready(fwd_nonorm(x))
    ref2 = reference(x, gamma, beta, use_norm=False)
    assert bool(jnp.allclose(out2, ref2)), "no-norm path mismatch"

    print("KERNEL_OK")
</pallas_src>

<mosaic_0001>
module attributes {stable_mosaic.version = 11 : i64} {
  func.func @patch_embed_norm_kernel(%arg0: i32, %arg1: memref<2x128x128xf32, #tpu.memory_space<vmem>>, %arg2: memref<128x1xf32, #tpu.memory_space<vmem>>, %arg3: memref<128x1xf32, #tpu.memory_space<vmem>>, %arg4: memref<2x128x128xf32, #tpu.memory_space<vmem>>) attributes {dimension_semantics = [#tpu.dimension_semantics<parallel>], iteration_bounds = array<i64: 2>, scalar_prefetch = 0 : i64, scratch_operands = 0 : i64, tpu.core_type = #tpu.core_type<tc>, window_params = [{transform_indices = @transform_0, window_bounds = array<i64: 2, 128, 128>}, {pipeline_mode = #tpu.pipeline_mode<synchronous>, transform_indices = @transform_1, window_bounds = array<i64: 128, 1>}, {pipeline_mode = #tpu.pipeline_mode<synchronous>, transform_indices = @transform_2, window_bounds = array<i64: 128, 1>}, {transform_indices = @transform_3, window_bounds = array<i64: 2, 128, 128>}]} {
    %c0 = arith.constant 0 : index
    %c0_0 = arith.constant 0 : index
    %0 = vector.load %arg2[%c0, %c0_0] : memref<128x1xf32, #tpu.memory_space<vmem>>, vector<128x1xf32>
    %c0_1 = arith.constant 0 : index
    %c0_2 = arith.constant 0 : index
    %1 = vector.load %arg3[%c0_1, %c0_2] : memref<128x1xf32, #tpu.memory_space<vmem>>, vector<128x1xf32>
    %c0_3 = arith.constant 0 : index
    %c0_4 = arith.constant 0 : index
    %c0_5 = arith.constant 0 : index
    %2 = vector.load %arg1[%c0_3, %c0_4, %c0_5] : memref<2x128x128xf32, #tpu.memory_space<vmem>>, vector<1x128x128xf32>
    %3 = vector.shape_cast %2 : vector<1x128x128xf32> to vector<128x128xf32>
    %cst = arith.constant dense<0.000000e+00> : vector<128xf32>
    %4 = vector.multi_reduction <add>, %3, %cst [0] : vector<128x128xf32> to vector<128xf32>
    %5 = vector.shape_cast %4 : vector<128xf32> to vector<1x128xf32>
    %cst_6 = arith.constant 7.812500e-03 : f32
    %6 = vector.broadcast %cst_6 : f32 to vector<1x128xf32>
    %7 = arith.mulf %5, %6 : vector<1x128xf32>
    %8 = vector.broadcast %7 : vector<1x128xf32> to vector<128x128xf32>
    %9 = arith.subf %3, %8 : vector<128x128xf32>
    %10 = arith.mulf %9, %9 : vector<128x128xf32>
    %cst_7 = arith.constant dense<0.000000e+00> : vector<128xf32>
    %11 = vector.multi_reduction <add>, %10, %cst_7 [0] : vector<128x128xf32> to vector<128xf32>
    %12 = vector.shape_cast %11 : vector<128xf32> to vector<1x128xf32>
    %cst_8 = arith.constant 7.812500e-03 : f32
    %13 = vector.broadcast %cst_8 : f32 to vector<1x128xf32>
    %14 = arith.mulf %12, %13 : vector<1x128xf32>
    %cst_9 = arith.constant 9.99999974E-6 : f32
    %15 = vector.broadcast %cst_9 : f32 to vector<1x128xf32>
    %16 = arith.addf %14, %15 : vector<1x128xf32>
    %17 = math.rsqrt %16 : vector<1x128xf32>
    %18 = vector.broadcast %17 : vector<1x128xf32> to vector<128x128xf32>
    %19 = arith.mulf %9, %18 : vector<128x128xf32>
    %20 = vector.broadcast %0 : vector<128x1xf32> to vector<128x128xf32>
    %21 = arith.mulf %19, %20 : vector<128x128xf32>
    %22 = vector.broadcast %1 : vector<128x1xf32> to vector<128x128xf32>
    %23 = arith.addf %21, %22 : vector<128x128xf32>
    %24 = tpu.transpose %23, [1, 0] : vector<128x128xf32> -> vector<128x128xf32>
    %c0_10 = arith.constant 0 : index
    %c0_11 = arith.constant 0 : index
    %c0_12 = arith.constant 0 : index
    %25 = vector.load %arg4[%c0_10, %c0_11, %c0_12] : memref<2x128x128xf32, #tpu.memory_space<vmem>>, vector<1x128x128xf32>
    %26 = vector.shape_cast %25 : vector<1x128x128xf32> to vector<128x128xf32>
    %27 = vector.shape_cast %24 : vector<128x128xf32> to vector<1x128x128xf32>
    tpu.vector_store %arg4[%c0_10, %c0_11, %c0_12], %27 {strides = array<i32>} : memref<2x128x128xf32, #tpu.memory_space<vmem>>, vector<1x128x128xf32>,
    %c1 = arith.constant 1 : index
    %c0_13 = arith.constant 0 : index
    %c0_14 = arith.constant 0 : index
    %28 = vector.load %arg1[%c1, %c0_13, %c0_14] : memref<2x128x128xf32, #tpu.memory_space<vmem>>, vector<1x128x128xf32>
    %29 = vector.shape_cast %28 : vector<1x128x128xf32> to vector<128x128xf32>
    %cst_15 = arith.constant dense<0.000000e+00> : vector<128xf32>
    %30 = vector.multi_reduction <add>, %29, %cst_15 [0] : vector<128x128xf32> to vector<128xf32>
    %31 = vector.shape_cast %30 : vector<128xf32> to vector<1x128xf32>
    %cst_16 = arith.constant 7.812500e-03 : f32
    %32 = vector.broadcast %cst_16 : f32 to vector<1x128xf32>
    %33 = arith.mulf %31, %32 : vector<1x128xf32>
    %34 = vector.broadcast %33 : vector<1x128xf32> to vector<128x128xf32>
    %35 = arith.subf %29, %34 : vector<128x128xf32>
    %36 = arith.mulf %35, %35 : vector<128x128xf32>
    %cst_17 = arith.constant dense<0.000000e+00> : vector<128xf32>
    %37 = vector.multi_reduction <add>, %36, %cst_17 [0] : vector<128x128xf32> to vector<128xf32>
    %38 = vector.shape_cast %37 : vector<128xf32> to vector<1x128xf32>
    %cst_18 = arith.constant 7.812500e-03 : f32
    %39 = vector.broadcast %cst_18 : f32 to vector<1x128xf32>
    %40 = arith.mulf %38, %39 : vector<1x128xf32>
    %cst_19 = arith.constant 9.99999974E-6 : f32
    %41 = vector.broadcast %cst_19 : f32 to vector<1x128xf32>
    %42 = arith.addf %40, %41 : vector<1x128xf32>
    %43 = math.rsqrt %42 : vector<1x128xf32>
    %44 = vector.broadcast %43 : vector<1x128xf32> to vector<128x128xf32>
    %45 = arith.mulf %35, %44 : vector<128x128xf32>
    %46 = vector.broadcast %0 : vector<128x1xf32> to vector<128x128xf32>
    %47 = arith.mulf %45, %46 : vector<128x128xf32>
    %48 = vector.broadcast %1 : vector<128x1xf32> to vector<128x128xf32>
    %49 = arith.addf %47, %48 : vector<128x128xf32>
    %50 = tpu.transpose %49, [1, 0] : vector<128x128xf32> -> vector<128x128xf32>
    %c1_20 = arith.constant 1 : index
    %c0_21 = arith.constant 0 : index
    %c0_22 = arith.constant 0 : index
    %51 = vector.load %arg4[%c1_20, %c0_21, %c0_22] : memref<2x128x128xf32, #tpu.memory_space<vmem>>, vector<1x128x128xf32>
    %52 = vector.shape_cast %51 : vector<1x128x128xf32> to vector<128x128xf32>
    %53 = vector.shape_cast %50 : vector<128x128xf32> to vector<1x128x128xf32>
    tpu.vector_store %arg4[%c1_20, %c0_21, %c0_22], %53 {strides = array<i32>} : memref<2x128x128xf32, #tpu.memory_space<vmem>>, vector<1x128x128xf32>,
    return
  }
  func.func @transform_0(%arg0: i32) -> (i32, i32, i32) {
    %c0_i32 = arith.constant 0 : i32
    %c0_i32_0 = arith.constant 0 : i32
    %c0_i32_1 = arith.constant 0 : i32
    return %c0_i32, %c0_i32_0, %arg0 : i32, i32, i32
  }
  func.func @transform_1(%arg0: i32) -> (i32, i32) {
    %c0_i32 = arith.constant 0 : i32
    %c0_i32_0 = arith.constant 0 : i32
    %c0_i32_1 = arith.constant 0 : i32
    return %c0_i32, %c0_i32_0 : i32, i32
  }
  func.func @transform_2(%arg0: i32) -> (i32, i32) {
    %c0_i32 = arith.constant 0 : i32
    %c0_i32_0 = arith.constant 0 : i32
    %c0_i32_1 = arith.constant 0 : i32
    return %c0_i32, %c0_i32_0 : i32, i32
  }
  func.func @transform_3(%arg0: i32) -> (i32, i32, i32) {
    %c0_i32 = arith.constant 0 : i32
    %c0_i32_0 = arith.constant 0 : i32
    %c0_i32_1 = arith.constant 0 : i32
    return %c0_i32, %arg0, %c0_i32_0 : i32, i32, i32
  }
}

</mosaic_0001>

<llo_original>
// kernel: patch_embed_forward.1
$region0: #{patch_embed_forward.1}
  #allocation0 [shape = 'u32[]', space=smem, size = 0x4, offset = 0x4, fixed_abs, tag = 'smem constant byte address 0x4 - core index']
  #allocation1 [shape = 'u32[144,128]{1,0:T(1,128)}', space=vmem, size = 0x12000, scoped, tag = 'internal scratch']
  #allocation5 [shape = 's32[]', space=sflag, size = 0x4, offset = 0, fixed_abs, tag = 'sflag constant byte address 0x0 - dummy sync flag']
  %s0 = inlined_call_operand.vmem [shape: f32[2,128,256], index: 0, kind: input, shape index: {}]
  %s1 = inlined_call_operand.vmem [shape: f32[128,1], index: 1, kind: input, shape index: {}]
  %s2 = inlined_call_operand.vmem [shape: f32[128,1], index: 2, kind: input, shape index: {}]
  %s3 = inlined_call_operand.hbm [shape: f32[2,256,128], index: 3, kind: output, shape index: {}]
  %s4 = sld [smem:[#allocation0]]
  $region83: #{patch_embed_forward.1} parent=0
    _
  %s6 = ssub.s32 1, %s4
  %s7 = scalar_select 0, %s6, %s4
  $region1: #{patch_embed_forward.1} parent=0
    #allocation2 [shape = 'u8[262144]{0}', space=vmem, size = 0x40000, scoped, tag = 'input window, operand 0']
    #allocation3 [shape = 'u8[262144]{0}', space=vmem, size = 0x40000, scoped, tag = 'output window, operand 0']
    #allocation4 [shape = 's32[2]{0}', space=sflag, size = 0x8, scoped, tag = 'scoped memory for patch_embed_forward.1']
    %8 = vsyncpa [#allocation4], 0
    %s9 = scalar_lea.sflag [#allocation4], 1
    %10 = vsyncpa %s9, 0
    loop: start=0, step=1, limit=4
    $region2: #{patch_embed_forward.1} parent=1 // loop_pre_header
      _
    $region3: #{patch_embed_forward.1} parent=1 // loop_header
      %s12 = sphi 0, %s16
      %p13 = scmp.ge.s32.totalorder %s12, 4
      %s22 = sphi 0, %s24
      %s25 = sphi 0, %s22
      %s26 = sphi 0, %s25
      %s42 = sphi 0, %s26
      %s46 = sphi 0, %s46
      %s48 = sphi 0, %s46
      %s49 = sphi 0, %s48
      %s63 = sphi 0, %s49
      %s67 = sphi 0, %s67
      %s69 = sphi 0, %s67
      %s70 = sphi 0, %s69
      %s84 = sphi 0, %s70
      %s90 = sphi 0, %s92
      %s93 = sphi 0, %s90
      %s94 = sphi 0, %s93
      %s110 = sphi 0, %s94
    $region4: #{patch_embed_forward.1} parent=1 // loop_header_branch
      %15 = sbr.rel (%p13) target = $region8
    $region5: #{patch_embed_forward.1} parent=1 // loop_body
      %s17 = ssub.s32 %s12, 1
      %s18 = ssub.s32 %s12, 2
      %s19 = sadd.s32 %s12, 1
      %s20 = ssub.s32 %s12, %s19
      %p21 = scmp.eq.s32.totalorder %s20, 0
      %s23 = sadd.s32 %s22, 1
      %s24 = scalar_select %p21, %s22, %s23
      %p27 = pneg %p21
      %p28 = scmp.eq.s32.totalorder %s12, 1
      %p29 = por %p27, %p28
      %p30 = scmp.ne.s32.totalorder %s22, %s25
      %p31 = scmp.eq.s32.totalorder %s12, 0
      %p32 = por %p30, %p31
      %p33 = scmp.ne.s32.totalorder %s22, %s25
      %p34 = scmp.eq.s32.totalorder %s17, 1
      %p35 = por %p33, %p34
      %p36 = scmp.ne.s32.totalorder %s25, %s26
      %p37 = scmp.eq.s32.totalorder %s17, 0
      %p38 = por %p36, %p37
      %p39 = scmp.ne.s32.totalorder %s25, %s26
      %p40 = scmp.eq.s32.totalorder %s18, 1
      %p41 = por %p39, %p40
      %p43 = scmp.ne.s32.totalorder %s26, %s42
      %p44 = scmp.eq.s32.totalorder %s18, 0
      %p45 = por %p43, %p44
      %s47 = sadd.s32 %s46, 1
      %p50 = scmp.eq.s32.totalorder %s12, 1
      %p51 = scmp.ne.s32.totalorder %s46, %s48
      %p52 = scmp.eq.s32.totalorder %s12, 0
      %p53 = por %p51, %p52
      %p54 = scmp.ne.s32.totalorder %s46, %s48
      %p55 = scmp.eq.s32.totalorder %s17, 1
      %p56 = por %p54, %p55
      %p57 = scmp.ne.s32.totalorder %s48, %s49
      %p58 = scmp.eq.s32.totalorder %s17, 0
      %p59 = por %p57, %p58
      %p60 = scmp.ne.s32.totalorder %s48, %s49
      %p61 = scmp.eq.s32.totalorder %s18, 1
      %p62 = por %p60, %p61
      %p64 = scmp.ne.s32.totalorder %s49, %s63
      %p65 = scmp.eq.s32.totalorder %s18, 0
      %p66 = por %p64, %p65
      %s68 = sadd.s32 %s67, 1
      %p71 = scmp.eq.s32.totalorder %s12, 1
      %p72 = scmp.ne.s32.totalorder %s67, %s69
      %p73 = scmp.eq.s32.totalorder %s12, 0
      %p74 = por %p72, %p73
      %p75 = scmp.ne.s32.totalorder %s67, %s69
      %p76 = scmp.eq.s32.totalorder %s17, 1
      %p77 = por %p75, %p76
      %p78 = scmp.ne.s32.totalorder %s69, %s70
      %p79 = scmp.eq.s32.totalorder %s17, 0
      %p80 = por %p78, %p79
      %p81 = scmp.ne.s32.totalorder %s69, %s70
      %p82 = scmp.eq.s32.totalorder %s18, 1
      %p83 = por %p81, %p82
      %p85 = scmp.ne.s32.totalorder %s70, %s84
      %p86 = scmp.eq.s32.totalorder %s18, 0
      %p87 = por %p85, %p86
      %s88 = ssub.s32 %s12, %s19
      %p89 = scmp.eq.s32.totalorder %s88, 0
      %s91 = sadd.s32 %s90, 1
      %s92 = scalar_select %p89, %s90, %s91
      %p95 = pneg %p89
      %p96 = scmp.eq.s32.totalorder %s12, 1
      %p97 = por %p95, %p96
      %p98 = scmp.ne.s32.totalorder %s90, %s93
      %p99 = scmp.eq.s32.totalorder %s12, 0
      %p100 = por %p98, %p99
      %p101 = scmp.ne.s32.totalorder %s90, %s93
      %p102 = scmp.eq.s32.totalorder %s17, 1
      %p103 = por %p101, %p102
      %p104 = scmp.ne.s32.totalorder %s93, %s94
      %p105 = scmp.eq.s32.totalorder %s17, 0
      %p106 = por %p104, %p105
      %p107 = scmp.ne.s32.totalorder %s93, %s94
      %p108 = scmp.eq.s32.totalorder %s18, 1
      %p109 = por %p107, %p108
      %p111 = scmp.ne.s32.totalorder %s94, %s110
      %p112 = scmp.eq.s32.totalorder %s18, 0
      %p113 = por %p111, %p112
      %p114 = scmp.le.s32.totalorder 1, %s12
      %p115 = scmp.lt.s32.totalorder %s12, 3
      %p116 = pnand %p114, %p115
      %p117 = pneg %p116
      // Predicated region
      $region9: #{patch_embed_forward.1} parent=5 // pred_check
        _
      $region10: #{patch_embed_forward.1} parent=5 // pred_check_branch
        %119 = sbr.rel (%p116) target = $region12
      $region11: #{patch_embed_forward.1} parent=5 // pred_region
        %s120 = ssub.s32 %s12, 1
        // Predicated region
        $region13: #{patch_embed_forward.1} parent=11 // pred_check
          %p121 = pneg %p59
        $region14: #{patch_embed_forward.1} parent=11 // pred_check_branch
          %123 = sbr.rel (%p121) target = $region16
        $region15: #{patch_embed_forward.1} parent=11 // pred_region
          _
        $region16: #{patch_embed_forward.1} parent=11 // pred_fallthru
          _
        // Predicated region
        $region17: #{patch_embed_forward.1} parent=11 // pred_check
          %p124 = pneg %p80
        $region18: #{patch_embed_forward.1} parent=11 // pred_check_branch
          %126 = sbr.rel (%p124) target = $region20
        $region19: #{patch_embed_forward.1} parent=11 // pred_region
          _
        $region20: #{patch_embed_forward.1} parent=11 // pred_fallthru
          _
      $region12: #{patch_embed_forward.1} parent=5 // pred_fallthru
        _
      %p127 = scmp.lt.s32.totalorder %s12, 2
      // Predicated region
      $region21: #{patch_embed_forward.1} parent=5 // pred_check
        %p128 = pneg %p127
      $region22: #{patch_embed_forward.1} parent=5 // pred_check_branch
        %130 = sbr.rel (%p128) target = $region24
      $region23: #{patch_embed_forward.1} parent=5 // pred_region
        // Predicated region
        $region25: #{patch_embed_forward.1} parent=23 // pred_check
          %p131 = pneg %p32
        $region26: #{patch_embed_forward.1} parent=23 // pred_check_branch
          %133 = sbr.rel (%p131) target = $region28
        $region27: #{patch_embed_forward.1} parent=23 // pred_region
          %s134 = sand.u32 %s22, 1
          %s135 = sand.u32 %s22, 1
          %s136 = smul.addr %s135, 256
          %s137 = scalar_lea.vmem [#allocation2], %s136
          %s138 = smul.addr %s12, 8
          %s139 = scalar_lea.vmem %s0, %s138
          // Predicated region
          $region29: #{patch_embed_forward.1} parent=27 // pred_check
            _
          $region30: #{patch_embed_forward.1} parent=27 // pred_check_branch
            %141 = sbr.rel (0) target = $region32
          $region31: #{patch_embed_forward.1} parent=27 // pred_region
            // Predicated region
            $region33: #{patch_embed_forward.1} parent=31 // pred_check
              _
            $region34: #{patch_embed_forward.1} parent=31 // pred_check_branch
              %143 = sbr.rel (0) target = $region36
            $region35: #{patch_embed_forward.1} parent=31 // pred_region
              // Predicated region
              $region48: #{patch_embed_forward.1} parent=35 // pred_check
                _
              $region49: #{patch_embed_forward.1} parent=35 // pred_check_branch
                %221 = sbr.rel (0) target = $region51
              $region50: #{patch_embed_forward.1} parent=35 // pred_region
                loop: start=0, step=1, limit=1
                $region52: #{patch_embed_forward.1} parent=50 // loop_pre_header
                  _
                $region53: #{patch_embed_forward.1} parent=50 // loop_header
                  %s223 = sphi 0, %s227
                  %p224 = scmp.ge.s32.totalorder %s223, 1
                  %s228 = sphi %s139, %s139
                  %s229 = sphi %s137, %s137
                $region54: #{patch_embed_forward.1} parent=50 // loop_header_branch
                  %226 = sbr.rel (%p224) target = $region58
                $region55: #{patch_embed_forward.1} parent=50 // loop_body
                  %v230 = vld [vmem:[%s228] sm:$0xff]
                  %231 = vst [vmem:[%s229] sm:$0xff] %v230
                  %v232 = vld [vmem:[%s228 + $0x10] sm:$0xff]
                  %233 = vst [vmem:[%s229 + $0x8] sm:$0xff] %v232
                  %v234 = vld [vmem:[%s228 + $0x20] sm:$0xff]
                  %235 = vst [vmem:[%s229 + $0x10] sm:$0xff] %v234
                  %v236 = vld [vmem:[%s228 + $0x30] sm:$0xff]
                  %237 = vst [vmem:[%s229 + $0x18] sm:$0xff] %v236
                  %v238 = vld [vmem:[%s228 + $0x40] sm:$0xff]
                  %239 = vst [vmem:[%s229 + $0x20] sm:$0xff] %v238
                  %v240 = vld [vmem:[%s228 + $0x50] sm:$0xff]
                  %241 = vst [vmem:[%s229 + $0x28] sm:$0xff] %v240
                  %v242 = vld [vmem:[%s228 + $0x60] sm:$0xff]
                  %243 = vst [vmem:[%s229 + $0x30] sm:$0xff] %v242
                  %v244 = vld [vmem:[%s228 + $0x70] sm:$0xff]
                  %245 = vst [vmem:[%s229 + $0x38] sm:$0xff] %v244
                  %v246 = vld [vmem:[%s228 + $0x80] sm:$0xff]
                  %247 = vst [vmem:[%s229 + $0x40] sm:$0xff] %v246
                  %v248 = vld [vmem:[%s228 + $0x90] sm:$0xff]
                  %249 = vst [vmem:[%s229 + $0x48] sm:$0xff] %v248
                  %v250 = vld [vmem:[%s228 + $0xa0] sm:$0xff]
                  %251 = vst [vmem:[%s229 + $0x50] sm:$0xff] %v250
                  %v252 = vld [vmem:[%s228 + $0xb0] sm:$0xff]
                  %253 = vst [vmem:[%s229 + $0x58] sm:$0xff] %v252
                  %v254 = vld [vmem:[%s228 + $0xc0] sm:$0xff]
                  %255 = vst [vmem:[%s229 + $0x60] sm:$0xff] %v254
                  %v256 = vld [vmem:[%s228 + $0xd0] sm:$0xff]
                  %257 = vst [vmem:[%s229 + $0x68] sm:$0xff] %v256
                  %v258 = vld [vmem:[%s228 + $0xe0] sm:$0xff]
                  %259 = vst [vmem:[%s229 + $0x70] sm:$0xff] %v258
                  %v260 = vld [vmem:[%s228 + $0xf0] sm:$0xff]
                  %261 = vst [vmem:[%s229 + $0x78] sm:$0xff] %v260
                  %v262 = vld [vmem:[%s228 + $0x100] sm:$0xff]
                  %263 = vst [vmem:[%s229 + $0x80] sm:$0xff] %v262
                  %v264 = vld [vmem:[%s228 + $0x110] sm:$0xff]
                  %265 = vst [vmem:[%s229 + $0x88] sm:$0xff] %v264
                  %v266 = vld [vmem:[%s228 + $0x120] sm:$0xff]
                  %267 = vst [vmem:[%s229 + $0x90] sm:$0xff] %v266
                  %v268 = vld [vmem:[%s228 + $0x130] sm:$0xff]
                  %269 = vst [vmem:[%s229 + $0x98] sm:$0xff] %v268
                  %v270 = vld [vmem:[%s228 + $0x140] sm:$0xff]
                  %271 = vst [vmem:[%s229 + $0xa0] sm:$0xff] %v270
                  %v272 = vld [vmem:[%s228 + $0x150] sm:$0xff]
                  %273 = vst [vmem:[%s229 + $0xa8] sm:$0xff] %v272
                  %v274 = vld [vmem:[%s228 + $0x160] sm:$0xff]
                  %275 = vst [vmem:[%s229 + $0xb0] sm:$0xff] %v274
                  %v276 = vld [vmem:[%s228 + $0x170] sm:$0xff]
                  %277 = vst [vmem:[%s229 + $0xb8] sm:$0xff] %v276
                  %v278 = vld [vmem:[%s228 + $0x180] sm:$0xff]
                  %279 = vst [vmem:[%s229 + $0xc0] sm:$0xff] %v278
                  %v280 = vld [vmem:[%s228 + $0x190] sm:$0xff]
                  %281 = vst [vmem:[%s229 + $0xc8] sm:$0xff] %v280
                  %v282 = vld [vmem:[%s228 + $0x1a0] sm:$0xff]
                  %283 = vst [vmem:[%s229 + $0xd0] sm:$0xff] %v282
                  %v284 = vld [vmem:[%s228 + $0x1b0] sm:$0xff]
                  %285 = vst [vmem:[%s229 + $0xd8] sm:$0xff] %v284
                  %v286 = vld [vmem:[%s228 + $0x1c0] sm:$0xff]
                  %287 = vst [vmem:[%s229 + $0xe0] sm:$0xff] %v286
                  %v288 = vld [vmem:[%s228 + $0x1d0] sm:$0xff]
                  %289 = vst [vmem:[%s229 + $0xe8] sm:$0xff] %v288
                  %v290 = vld [vmem:[%s228 + $0x1e0] sm:$0xff]
                  %291 = vst [vmem:[%s229 + $0xf0] sm:$0xff] %v290
                  %v292 = vld [vmem:[%s228 + $0x1f0] sm:$0xff]
                  %293 = vst [vmem:[%s229 + $0xf8] sm:$0xff] %v292
                $region56: #{patch_embed_forward.1} parent=50 // loop_footer
                  %s227 = sadd.s32 1, %s223
                $region57: #{patch_embed_forward.1} parent=50 // loop_footer_branch
                  %222 = sbr.rel target = $region53
                $region58: #{patch_embed_forward.1} parent=50 // loop_exit
                  _
              $region51: #{patch_embed_forward.1} parent=35 // pred_fallthru
                _
              // Predicated region
              $region59: #{patch_embed_forward.1} parent=35 // pred_check
                _
              $region60: #{patch_embed_forward.1} parent=35 // pred_check_branch
                %295 = sbr.rel target = $region62
              $region61: #{patch_embed_forward.1} parent=35 // pred_region
                _
              $region62: #{patch_embed_forward.1} parent=35 // pred_fallthru
                _
            $region36: #{patch_embed_forward.1} parent=31 // pred_fallthru
              _
            // Predicated region
            $region37: #{patch_embed_forward.1} parent=31 // pred_check
              _
            $region38: #{patch_embed_forward.1} parent=31 // pred_check_branch
              %145 = sbr.rel target = $region40
            $region39: #{patch_embed_forward.1} parent=31 // pred_region
              %s147 = ssub.s32 256, 1
              loop: start=0, step=1, limit=1
              $region41: #{patch_embed_forward.1} parent=39 // loop_pre_header
                _
              $region42: #{patch_embed_forward.1} parent=39 // loop_header
                %s149 = sphi 0, %s153
                %p150 = scmp.ge.s32.totalorder %s149, 1
                %s154 = sphi %s139, %s139
                %s155 = sphi %s137, %s137
              $region43: #{patch_embed_forward.1} parent=39 // loop_header_branch
                %152 = sbr.rel (%p150) target = $region47
              $region44: #{patch_embed_forward.1} parent=39 // loop_body
                %v156 = vld [vmem:[%s154] sm:%s147]
                %157 = vst [vmem:[%s155] sm:%s147] %v156
                %v158 = vld [vmem:[%s154 + $0x10] sm:%s147]
                %159 = vst [vmem:[%s155 + $0x8] sm:%s147] %v158
                %v160 = vld [vmem:[%s154 + $0x20] sm:%s147]
                %161 = vst [vmem:[%s155 + $0x10] sm:%s147] %v160
                %v162 = vld [vmem:[%s154 + $0x30] sm:%s147]
                %163 = vst [vmem:[%s155 + $0x18] sm:%s147] %v162
                %v164 = vld [vmem:[%s154 + $0x40] sm:%s147]
                %165 = vst [vmem:[%s155 + $0x20] sm:%s147] %v164
                %v166 = vld [vmem:[%s154 + $0x50] sm:%s147]
                %167 = vst [vmem:[%s155 + $0x28] sm:%s147] %v166
                %v168 = vld [vmem:[%s154 + $0x60] sm:%s147]
                %169 = vst [vmem:[%s155 + $0x30] sm:%s147] %v168
                %v170 = vld [vmem:[%s154 + $0x70] sm:%s147]
                %171 = vst [vmem:[%s155 + $0x38] sm:%s147] %v170
                %v172 = vld [vmem:[%s154 + $0x80] sm:%s147]
                %173 = vst [vmem:[%s155 + $0x40] sm:%s147] %v172
                %v174 = vld [vmem:[%s154 + $0x90] sm:%s147]
                %175 = vst [vmem:[%s155 + $0x48] sm:%s147] %v174
                %v176 = vld [vmem:[%s154 + $0xa0] sm:%s147]
                %177 = vst [vmem:[%s155 + $0x50] sm:%s147] %v176
                %v178 = vld [vmem:[%s154 + $0xb0] sm:%s147]
                %179 = vst [vmem:[%s155 + $0x58] sm:%s147] %v178
                %v180 = vld [vmem:[%s154 + $0xc0] sm:%s147]
                %181 = vst [vmem:[%s155 + $0x60] sm:%s147] %v180
                %v182 = vld [vmem:[%s154 + $0xd0] sm:%s147]
                %183 = vst [vmem:[%s155 + $0x68] sm:%s147] %v182
                %v184 = vld [vmem:[%s154 + $0xe0] sm:%s147]
                %185 = vst [vmem:[%s155 + $0x70] sm:%s147] %v184
                %v186 = vld [vmem:[%s154 + $0xf0] sm:%s147]
                %187 = vst [vmem:[%s155 + $0x78] sm:%s147] %v186
                %v188 = vld [vmem:[%s154 + $0x100] sm:%s147]
                %189 = vst [vmem:[%s155 + $0x80] sm:%s147] %v188
                %v190 = vld [vmem:[%s154 + $0x110] sm:%s147]
                %191 = vst [vmem:[%s155 + $0x88] sm:%s147] %v190
                %v192 = vld [vmem:[%s154 + $0x120] sm:%s147]
                %193 = vst [vmem:[%s155 + $0x90] sm:%s147] %v192
                %v194 = vld [vmem:[%s154 + $0x130] sm:%s147]
                %195 = vst [vmem:[%s155 + $0x98] sm:%s147] %v194
                %v196 = vld [vmem:[%s154 + $0x140] sm:%s147]
                %197 = vst [vmem:[%s155 + $0xa0] sm:%s147] %v196
                %v198 = vld [vmem:[%s154 + $0x150] sm:%s147]
                %199 = vst [vmem:[%s155 + $0xa8] sm:%s147] %v198
                %v200 = vld [vmem:[%s154 + $0x160] sm:%s147]
                %201 = vst [vmem:[%s155 + $0xb0] sm:%s147] %v200
                %v202 = vld [vmem:[%s154 + $0x170] sm:%s147]
                %203 = vst [vmem:[%s155 + $0xb8] sm:%s147] %v202
                %v204 = vld [vmem:[%s154 + $0x180] sm:%s147]
                %205 = vst [vmem:[%s155 + $0xc0] sm:%s147] %v204
                %v206 = vld [vmem:[%s154 + $0x190] sm:%s147]
                %207 = vst [vmem:[%s155 + $0xc8] sm:%s147] %v206
                %v208 = vld [vmem:[%s154 + $0x1a0] sm:%s147]
                %209 = vst [vmem:[%s155 + $0xd0] sm:%s147] %v208
                %v210 = vld [vmem:[%s154 + $0x1b0] sm:%s147]
                %211 = vst [vmem:[%s155 + $0xd8] sm:%s147] %v210
                %v212 = vld [vmem:[%s154 + $0x1c0] sm:%s147]
                %213 = vst [vmem:[%s155 + $0xe0] sm:%s147] %v212
                %v214 = vld [vmem:[%s154 + $0x1d0] sm:%s147]
                %215 = vst [vmem:[%s155 + $0xe8] sm:%s147] %v214
                %v216 = vld [vmem:[%s154 + $0x1e0] sm:%s147]
                %217 = vst [vmem:[%s155 + $0xf0] sm:%s147] %v216
                %v218 = vld [vmem:[%s154 + $0x1f0] sm:%s147]
                %219 = vst [vmem:[%s155 + $0xf8] sm:%s147] %v218
              $region45: #{patch_embed_forward.1} parent=39 // loop_footer
                %s153 = sadd.s32 1, %s149
              $region46: #{patch_embed_forward.1} parent=39 // loop_footer_branch
                %148 = sbr.rel target = $region42
              $region47: #{patch_embed_forward.1} parent=39 // loop_exit
                _
            $region40: #{patch_embed_forward.1} parent=31 // pred_fallthru
              _
          $region32: #{patch_embed_forward.1} parent=27 // pred_fallthru
            _
          %296 = vnop
        $region28: #{patch_embed_forward.1} parent=23 // pred_fallthru
          _
      $region24: #{patch_embed_forward.1} parent=5 // pred_fallthru
        _
      %p297 = scmp.le.s32.totalorder 1, %s12
      %p298 = scmp.lt.s32.totalorder %s12, 3
      %p299 = pnand %p297, %p298
      %p300 = pneg %p299
      // Predicated region
      $region63: #{patch_embed_forward.1} parent=5 // pred_check
        _
      $region64: #{patch_embed_forward.1} parent=5 // pred_check_branch
        %302 = sbr.rel (%p299) target = $region66
      $region65: #{patch_embed_forward.1} parent=5 // pred_region
        %s303 = ssub.s32 %s12, 1
        %s304 = sand.u32 %s25, 1
        %s305 = sand.u32 %s25, 1
        %s306 = smul.addr %s305, 256
        %s307 = scalar_lea.vmem [#allocation2], %s306
        // Predicated region
        $region67: #{patch_embed_forward.1} parent=65 // pred_check
          %p308 = pneg %p38
        $region68: #{patch_embed_forward.1} parent=65 // pred_check_branch
          %310 = sbr.rel (%p308) target = $region70
        $region69: #{patch_embed_forward.1} parent=65 // pred_region
          _
        $region70: #{patch_embed_forward.1} parent=65 // pred_fallthru
          _
        %s311 = sand.u32 %s25, 1
        %s312 = sand.u32 %s25, 1
        %s313 = smul.addr %s312, 256
        %s314 = scalar_lea.vmem [#allocation2], %s313
        %p315 = pneg %p38
        %p316 = pneg %p35
        %p317 = pneg %p59
        %p318 = pneg %p56
        %p319 = pneg %p80
        %p320 = pneg %p77
        %p321 = pneg %p106
        %p322 = pneg %p103
        %s323 = sand.u32 %s93, 1
        %s324 = scalar_lea.sflag [#allocation4], %s323
        %s325 = sand.u32 %s93, 1
        %s326 = smul.addr %s325, 256
        %s327 = scalar_lea.vmem [#allocation3], %s326
        %s328 = smul.u32 16, %s17
        %v329 = vld [vmem:[%s1] sm:$0xff]
        %v330 = vld [vmem:[%s1 + $0x8] sm:$0xff]
        %v331 = vld [vmem:[%s1 + $0x10] sm:$0xff]
        %v332 = vld [vmem:[%s1 + $0x18] sm:$0xff]
        %v333 = vld [vmem:[%s1 + $0x20] sm:$0xff]
        %v334 = vld [vmem:[%s1 + $0x28] sm:$0xff]
        %v335 = vld [vmem:[%s1 + $0x30] sm:$0xff]
        %v336 = vld [vmem:[%s1 + $0x38] sm:$0xff]
        %v337 = vld [vmem:[%s1 + $0x40] sm:$0xff]
        %v338 = vld [vmem:[%s1 + $0x48] sm:$0xff]
        %v339 = vld [vmem:[%s1 + $0x50] sm:$0xff]
        %v340 = vld [vmem:[%s1 + $0x58] sm:$0xff]
        %v341 = vld [vmem:[%s1 + $0x60] sm:$0xff]
        %v342 = vld [vmem:[%s1 + $0x68] sm:$0xff]
        %v343 = vld [vmem:[%s1 + $0x70] sm:$0xff]
        %v344 = vld [vmem:[%s1 + $0x78] sm:$0xff]
        %v345 = vld [vmem:[%s2] sm:$0xff]
        %v346 = vld [vmem:[%s2 + $0x8] sm:$0xff]
        %v347 = vld [vmem:[%s2 + $0x10] sm:$0xff]
        %v348 = vld [vmem:[%s2 + $0x18] sm:$0xff]
        %v349 = vld [vmem:[%s2 + $0x20] sm:$0xff]
        %v350 = vld [vmem:[%s2 + $0x28] sm:$0xff]
        %v351 = vld [vmem:[%s2 + $0x30] sm:$0xff]
        %v352 = vld [vmem:[%s2 + $0x38] sm:$0xff]
        %v353 = vld [vmem:[%s2 + $0x40] sm:$0xff]
        %v354 = vld [vmem:[%s2 + $0x48] sm:$0xff]
        %v355 = vld [vmem:[%s2 + $0x50] sm:$0xff]
        %v356 = vld [vmem:[%s2 + $0x58] sm:$0xff]
        %v357 = vld [vmem:[%s2 + $0x60] sm:$0xff]
        %v358 = vld [vmem:[%s2 + $0x68] sm:$0xff]
        %v359 = vld [vmem:[%s2 + $0x70] sm:$0xff]
        %v360 = vld [vmem:[%s2 + $0x78] sm:$0xff]
        %v361 = vld [vmem:[%s307] sm:$0xff]
        %v362 = vld [vmem:[%s307 + $0x8] sm:$0xff]
        %v363 = vld [vmem:[%s307 + $0x10] sm:$0xff]
        %v364 = vld [vmem:[%s307 + $0x18] sm:$0xff]
        %v365 = vld [vmem:[%s307 + $0x20] sm:$0xff]
        %v366 = vld [vmem:[%s307 + $0x28] sm:$0xff]
        %v367 = vld [vmem:[%s307 + $0x30] sm:$0xff]
        %v368 = vld [vmem:[%s307 + $0x38] sm:$0xff]
        %v369 = vld [vmem:[%s307 + $0x40] sm:$0xff]
        %v370 = vld [vmem:[%s307 + $0x48] sm:$0xff]
        %v371 = vld [vmem:[%s307 + $0x50] sm:$0xff]
        %v372 = vld [vmem:[%s307 + $0x58] sm:$0xff]
        %v373 = vld [vmem:[%s307 + $0x60] sm:$0xff]
        %v374 = vld [vmem:[%s307 + $0x68] sm:$0xff]
        %v375 = vld [vmem:[%s307 + $0x70] sm:$0xff]
        %v376 = vld [vmem:[%s307 + $0x78] sm:$0xff]
        %v377 = vadd.f32 %v361, %v362
        %v378 = vadd.f32 %v377, %v363
        %v379 = vadd.f32 %v378, %v364
        %v380 = vadd.f32 %v379, %v365
        %v381 = vadd.f32 %v380, %v366
        %v382 = vadd.f32 %v381, %v367
        %v383 = vadd.f32 %v382, %v368
        %v384 = vadd.f32 %v383, %v369
        %v385 = vadd.f32 %v384, %v370
        %v386 = vadd.f32 %v385, %v371
        %v387 = vadd.f32 %v386, %v372
        %v388 = vadd.f32 %v387, %v373
        %v389 = vadd.f32 %v388, %v374
        %v390 = vadd.f32 %v389, %v375
        %v391 = vadd.f32 %v390, %v376
        %v392 = vrot.slane %v391, 4
        %v393 = vadd.f32 %v391, %v392
        %v394 = vrot.slane %v393, 2
        %v395 = vadd.f32 %v393, %v394
        %v396 = vrot.slane %v395, 1
        %v397 = vadd.f32 %v395, %v396
        %v398 = vmul.f32 %v397, 0.0078125
        %v399 = vsub.f32 %v361, %v398
        %v400 = vsub.f32 %v362, %v398
        %v401 = vsub.f32 %v363, %v398
        %v402 = vsub.f32 %v364, %v398
        %v403 = vsub.f32 %v365, %v398
        %v404 = vsub.f32 %v366, %v398
        %v405 = vsub.f32 %v367, %v398
        %v406 = vsub.f32 %v368, %v398
        %v407 = vsub.f32 %v369, %v398
        %v408 = vsub.f32 %v370, %v398
        %v409 = vsub.f32 %v371, %v398
        %v410 = vsub.f32 %v372, %v398
        %v411 = vsub.f32 %v373, %v398
        %v412 = vsub.f32 %v374, %v398
        %v413 = vsub.f32 %v375, %v398
        %v414 = vsub.f32 %v376, %v398
        %v415 = vmul.f32 %v399, %v399
        %v416 = vmul.f32 %v400, %v400
        %v417 = vmul.f32 %v401, %v401
        %v418 = vmul.f32 %v402, %v402
        %v419 = vmul.f32 %v403, %v403
        %v420 = vmul.f32 %v404, %v404
        %v421 = vmul.f32 %v405, %v405
        %v422 = vmul.f32 %v406, %v406
        %v423 = vmul.f32 %v407, %v407
        %v424 = vmul.f32 %v408, %v408
        %v425 = vmul.f32 %v409, %v409
        %v426 = vmul.f32 %v410, %v410
        %v427 = vmul.f32 %v411, %v411
        %v428 = vmul.f32 %v412, %v412
        %v429 = vmul.f32 %v413, %v413
        %v430 = vmul.f32 %v414, %v414
        %v431 = vadd.f32 %v415, %v416
        %v432 = vadd.f32 %v431, %v417
        %v433 = vadd.f32 %v432, %v418
        %v434 = vadd.f32 %v433, %v419
        %v435 = vadd.f32 %v434, %v420
        %v436 = vadd.f32 %v435, %v421
        %v437 = vadd.f32 %v436, %v422
        %v438 = vadd.f32 %v437, %v423
        %v439 = vadd.f32 %v438, %v424
        %v440 = vadd.f32 %v439, %v425
        %v441 = vadd.f32 %v440, %v426
        %v442 = vadd.f32 %v441, %v427
        %v443 = vadd.f32 %v442, %v428
        %v444 = vadd.f32 %v443, %v429
        %v445 = vadd.f32 %v444, %v430
        %v446 = vrot.slane %v445, 4
        %v447 = vadd.f32 %v445, %v446
        %v448 = vrot.slane %v447, 2
        %v449 = vadd.f32 %v447, %v448
        %v450 = vrot.slane %v449, 1
        %v451 = vadd.f32 %v449, %v450
        %v452 = vmul.f32 %v451, 0.0078125
        %v453 = vadd.f32 %v452, 1e-05
        %v454 = vrsqrt.pop %v453
        %v455 = vmul.f32 %v399, %v454
        %v456 = vmul.f32 %v400, %v454
        %v457 = vmul.f32 %v401, %v454
        %v458 = vmul.f32 %v402, %v454
        %v459 = vmul.f32 %v403, %v454
        %v460 = vmul.f32 %v404, %v454
        %v461 = vmul.f32 %v405, %v454
        %v462 = vmul.f32 %v406, %v454
        %v463 = vmul.f32 %v407, %v454
        %v464 = vmul.f32 %v408, %v454
        %v465 = vmul.f32 %v409, %v454
        %v466 = vmul.f32 %v410, %v454
        %v467 = vmul.f32 %v411, %v454
        %v468 = vmul.f32 %v412, %v454
        %v469 = vmul.f32 %v413, %v454
        %v470 = vmul.f32 %v414, %v454
        %472 = vset.pattern.permute.xlu0 0
        %473 = vperm.xlu0 %472, %v329
        %v474 = vpop.permute.xlu0 %473
        %477 = vset.pattern.permute.xlu0 0
        %478 = vperm.xlu0 %477, %v330
        %v479 = vpop.permute.xlu0 %478
        %482 = vset.pattern.permute.xlu0 0
        %483 = vperm.xlu0 %482, %v331
        %v484 = vpop.permute.xlu0 %483
        %487 = vset.pattern.permute.xlu0 0
        %488 = vperm.xlu0 %487, %v332
        %v489 = vpop.permute.xlu0 %488
        %492 = vset.pattern.permute.xlu0 0
        %493 = vperm.xlu0 %492, %v333
        %v494 = vpop.permute.xlu0 %493
        %497 = vset.pattern.permute.xlu0 0
        %498 = vperm.xlu0 %497, %v334
        %v499 = vpop.permute.xlu0 %498
        %502 = vset.pattern.permute.xlu0 0
        %503 = vperm.xlu0 %502, %v335
        %v504 = vpop.permute.xlu0 %503
        %507 = vset.pattern.permute.xlu0 0
        %508 = vperm.xlu0 %507, %v336
        %v509 = vpop.permute.xlu0 %508
        %512 = vset.pattern.permute.xlu0 0
        %513 = vperm.xlu0 %512, %v337
        %v514 = vpop.permute.xlu0 %513
        %517 = vset.pattern.permute.xlu0 0
        %518 = vperm.xlu0 %517, %v338
        %v519 = vpop.permute.xlu0 %518
        %522 = vset.pattern.permute.xlu0 0
        %523 = vperm.xlu0 %522, %v339
        %v524 = vpop.permute.xlu0 %523
        %527 = vset.pattern.permute.xlu0 0
        %528 = vperm.xlu0 %527, %v340
        %v529 = vpop.permute.xlu0 %528
        %532 = vset.pattern.permute.xlu0 0
        %533 = vperm.xlu0 %532, %v341
        %v534 = vpop.permute.xlu0 %533
        %537 = vset.pattern.permute.xlu0 0
        %538 = vperm.xlu0 %537, %v342
        %v539 = vpop.permute.xlu0 %538
        %542 = vset.pattern.permute.xlu0 0
        %543 = vperm.xlu0 %542, %v343
        %v544 = vpop.permute.xlu0 %543
        %547 = vset.pattern.permute.xlu0 0
        %548 = vperm.xlu0 %547, %v344
        %v549 = vpop.permute.xlu0 %548
        %v551 = vmul.f32 %v455, %v474
        %v552 = vmul.f32 %v456, %v479
        %v553 = vmul.f32 %v457, %v484
        %v554 = vmul.f32 %v458, %v489
        %v555 = vmul.f32 %v459, %v494
        %v556 = vmul.f32 %v460, %v499
        %v557 = vmul.f32 %v461, %v504
        %v558 = vmul.f32 %v462, %v509
        %v559 = vmul.f32 %v463, %v514
        %v560 = vmul.f32 %v464, %v519
        %v561 = vmul.f32 %v465, %v524
        %v562 = vmul.f32 %v466, %v529
        %v563 = vmul.f32 %v467, %v534
        %v564 = vmul.f32 %v468, %v539
        %v565 = vmul.f32 %v469, %v544
        %v566 = vmul.f32 %v470, %v549
        %568 = vset.pattern.permute.xlu0 0
        %569 = vperm.xlu0 %568, %v345
        %v570 = vpop.permute.xlu0 %569
        %573 = vset.pattern.permute.xlu0 0
        %574 = vperm.xlu0 %573, %v346
        %v575 = vpop.permute.xlu0 %574
        %578 = vset.pattern.permute.xlu0 0
        %579 = vperm.xlu0 %578, %v347
        %v580 = vpop.permute.xlu0 %579
        %583 = vset.pattern.permute.xlu0 0
        %584 = vperm.xlu0 %583, %v348
        %v585 = vpop.permute.xlu0 %584
        %588 = vset.pattern.permute.xlu0 0
        %589 = vperm.xlu0 %588, %v349
        %v590 = vpop.permute.xlu0 %589
        %593 = vset.pattern.permute.xlu0 0
        %594 = vperm.xlu0 %593, %v350
        %v595 = vpop.permute.xlu0 %594
        %598 = vset.pattern.permute.xlu0 0
        %599 = vperm.xlu0 %598, %v351
        %v600 = vpop.permute.xlu0 %599
        %603 = vset.pattern.permute.xlu0 0
        %604 = vperm.xlu0 %603, %v352
        %v605 = vpop.permute.xlu0 %604
        %608 = vset.pattern.permute.xlu0 0
        %609 = vperm.xlu0 %608, %v353
        %v610 = vpop.permute.xlu0 %609
        %613 = vset.pattern.permute.xlu0 0
        %614 = vperm.xlu0 %613, %v354
        %v615 = vpop.permute.xlu0 %614
        %618 = vset.pattern.permute.xlu0 0
        %619 = vperm.xlu0 %618, %v355
        %v620 = vpop.permute.xlu0 %619
        %623 = vset.pattern.permute.xlu0 0
        %624 = vperm.xlu0 %623, %v356
        %v625 = vpop.permute.xlu0 %624
        %628 = vset.pattern.permute.xlu0 0
        %629 = vperm.xlu0 %628, %v357
        %v630 = vpop.permute.xlu0 %629
        %633 = vset.pattern.permute.xlu0 0
        %634 = vperm.xlu0 %633, %v358
        %v635 = vpop.permute.xlu0 %634
        %638 = vset.pattern.permute.xlu0 0
        %639 = vperm.xlu0 %638, %v359
        %v640 = vpop.permute.xlu0 %639
        %643 = vset.pattern.permute.xlu0 0
        %644 = vperm.xlu0 %643, %v360
        %v645 = vpop.permute.xlu0 %644
        %v647 = vadd.f32 %v551, %v570
        %v648 = vadd.f32 %v552, %v575
        %v649 = vadd.f32 %v553, %v580
        %v650 = vadd.f32 %v554, %v585
        %v651 = vadd.f32 %v555, %v590
        %v652 = vadd.f32 %v556, %v595
        %v653 = vadd.f32 %v557, %v600
        %v654 = vadd.f32 %v558, %v605
        %v655 = vadd.f32 %v559, %v610
        %v656 = vadd.f32 %v560, %v615
        %v657 = vadd.f32 %v561, %v620
        %v658 = vadd.f32 %v562, %v625
        %v659 = vadd.f32 %v563, %v630
        %v660 = vadd.f32 %v564, %v635
        %v661 = vadd.f32 %v565, %v640
        %v662 = vadd.f32 %v566, %v645
        %663 = vxpose.xlu0.b32.start [1/16] %v647, 128
        %664 = vxpose.xlu0.b32.cont [2/16] %v648, 128
        %665 = vxpose.xlu0.b32.cont [3/16] %v649, 128
        %666 = vxpose.xlu0.b32.cont [4/16] %v650, 128
        %667 = vxpose.xlu0.b32.cont [5/16] %v651, 128
        %668 = vxpose.xlu0.b32.cont [6/16] %v652, 128
        %669 = vxpose.xlu0.b32.cont [7/16] %v653, 128
        %670 = vxpose.xlu0.b32.cont [8/16] %v654, 128
        %671 = vxpose.xlu0.b32.cont [9/16] %v655, 128
        %672 = vxpose.xlu0.b32.cont [10/16] %v656, 128
        %673 = vxpose.xlu0.b32.cont [11/16] %v657, 128
        %674 = vxpose.xlu0.b32.cont [12/16] %v658, 128
        %675 = vxpose.xlu0.b32.cont [13/16] %v659, 128
        %676 = vxpose.xlu0.b32.cont [14/16] %v660, 128
        %677 = vxpose.xlu0.b32.cont [15/16] %v661, 128
        %678 = vxpose.xlu0.b32.end [16/16] %v662, 128
        %v679 = vpop.trf.xlu0
        %v680 = vpop.trf.xlu0
        %v681 = vpop.trf.xlu0
        %v682 = vpop.trf.xlu0
        %v683 = vpop.trf.xlu0
        %v684 = vpop.trf.xlu0
        %v685 = vpop.trf.xlu0
        %v686 = vpop.trf.xlu0
        %v687 = vpop.trf.xlu0
        %v688 = vpop.trf.xlu0
        %v689 = vpop.trf.xlu0
        %v690 = vpop.trf.xlu0
        %v691 = vpop.trf.xlu0
        %v692 = vpop.trf.xlu0
        %v693 = vpop.trf.xlu0
        %v694 = vpop.trf.xlu0
        %695 = vst [vmem:[%s327] sm:$0xff] %v679
        %696 = vst [vmem:[%s327 + $0x8] sm:$0xff] %v680
        %697 = vst [vmem:[%s327 + $0x10] sm:$0xff] %v681
        %698 = vst [vmem:[%s327 + $0x18] sm:$0xff] %v682
        %699 = vst [vmem:[%s327 + $0x20] sm:$0xff] %v683
        %700 = vst [vmem:[%s327 + $0x28] sm:$0xff] %v684
        %701 = vst [vmem:[%s327 + $0x30] sm:$0xff] %v685
        %702 = vst [vmem:[%s327 + $0x38] sm:$0xff] %v686
        %703 = vst [vmem:[%s327 + $0x40] sm:$0xff] %v687
        %704 = vst [vmem:[%s327 + $0x48] sm:$0xff] %v688
        %705 = vst [vmem:[%s327 + $0x50] sm:$0xff] %v689
        %706 = vst [vmem:[%s327 + $0x58] sm:$0xff] %v690
        %707 = vst [vmem:[%s327 + $0x60] sm:$0xff] %v691
        %708 = vst [vmem:[%s327 + $0x68] sm:$0xff] %v692
        %709 = vst [vmem:[%s327 + $0x70] sm:$0xff] %v693
        %710 = vst [vmem:[%s327 + $0x78] sm:$0xff] %v694
        %s711 = scalar_lea.vmem %s307, 128 [#allocation2]
        %v712 = vld [vmem:[%s711] sm:$0xff]
        %v713 = vld [vmem:[%s711 + $0x8] sm:$0xff]
        %v714 = vld [vmem:[%s711 + $0x10] sm:$0xff]
        %v715 = vld [vmem:[%s711 + $0x18] sm:$0xff]
        %v716 = vld [vmem:[%s711 + $0x20] sm:$0xff]
        %v717 = vld [vmem:[%s711 + $0x28] sm:$0xff]
        %v718 = vld [vmem:[%s711 + $0x30] sm:$0xff]
        %v719 = vld [vmem:[%s711 + $0x38] sm:$0xff]
        %v720 = vld [vmem:[%s711 + $0x40] sm:$0xff]
        %v721 = vld [vmem:[%s711 + $0x48] sm:$0xff]
        %v722 = vld [vmem:[%s711 + $0x50] sm:$0xff]
        %v723 = vld [vmem:[%s711 + $0x58] sm:$0xff]
        %v724 = vld [vmem:[%s711 + $0x60] sm:$0xff]
        %v725 = vld [vmem:[%s711 + $0x68] sm:$0xff]
        %v726 = vld [vmem:[%s711 + $0x70] sm:$0xff]
        %v727 = vld [vmem:[%s711 + $0x78] sm:$0xff]
        %v728 = vadd.f32 %v712, %v713
        %v729 = vadd.f32 %v728, %v714
        %v730 = vadd.f32 %v729, %v715
        %v731 = vadd.f32 %v730, %v716
        %v732 = vadd.f32 %v731, %v717
        %v733 = vadd.f32 %v732, %v718
        %v734 = vadd.f32 %v733, %v719
        %v735 = vadd.f32 %v734, %v720
        %v736 = vadd.f32 %v735, %v721
        %v737 = vadd.f32 %v736, %v722
        %v738 = vadd.f32 %v737, %v723
        %v739 = vadd.f32 %v738, %v724
        %v740 = vadd.f32 %v739, %v725
        %v741 = vadd.f32 %v740, %v726
        %v742 = vadd.f32 %v741, %v727
        %v743 = vrot.slane %v742, 4
        %v744 = vadd.f32 %v742, %v743
        %v745 = vrot.slane %v744, 2
        %v746 = vadd.f32 %v744, %v745
        %v747 = vrot.slane %v746, 1
        %v748 = vadd.f32 %v746, %v747
        %v749 = vmul.f32 %v748, 0.0078125
        %v750 = vsub.f32 %v712, %v749
        %v751 = vsub.f32 %v713, %v749
        %v752 = vsub.f32 %v714, %v749
        %v753 = vsub.f32 %v715, %v749
        %v754 = vsub.f32 %v716, %v749
        %v755 = vsub.f32 %v717, %v749
        %v756 = vsub.f32 %v718, %v749
        %v757 = vsub.f32 %v719, %v749
        %v758 = vsub.f32 %v720, %v749
        %v759 = vsub.f32 %v721, %v749
        %v760 = vsub.f32 %v722, %v749
        %v761 = vsub.f32 %v723, %v749
        %v762 = vsub.f32 %v724, %v749
        %v763 = vsub.f32 %v725, %v749
        %v764 = vsub.f32 %v726, %v749
        %v765 = vsub.f32 %v727, %v749
        %v766 = vmul.f32 %v750, %v750
        %v767 = vmul.f32 %v751, %v751
        %v768 = vmul.f32 %v752, %v752
        %v769 = vmul.f32 %v753, %v753
        %v770 = vmul.f32 %v754, %v754
        %v771 = vmul.f32 %v755, %v755
        %v772 = vmul.f32 %v756, %v756
        %v773 = vmul.f32 %v757, %v757
        %v774 = vmul.f32 %v758, %v758
        %v775 = vmul.f32 %v759, %v759
        %v776 = vmul.f32 %v760, %v760
        %v777 = vmul.f32 %v761, %v761
        %v778 = vmul.f32 %v762, %v762
        %v779 = vmul.f32 %v763, %v763
        %v780 = vmul.f32 %v764, %v764
        %v781 = vmul.f32 %v765, %v765
        %v782 = vadd.f32 %v766, %v767
        %v783 = vadd.f32 %v782, %v768
        %v784 = vadd.f32 %v783, %v769
        %v785 = vadd.f32 %v784, %v770
        %v786 = vadd.f32 %v785, %v771
        %v787 = vadd.f32 %v786, %v772
        %v788 = vadd.f32 %v787, %v773
        %v789 = vadd.f32 %v788, %v774
        %v790 = vadd.f32 %v789, %v775
        %v791 = vadd.f32 %v790, %v776
        %v792 = vadd.f32 %v791, %v777
        %v793 = vadd.f32 %v792, %v778
        %v794 = vadd.f32 %v793, %v779
        %v795 = vadd.f32 %v794, %v780
        %v796 = vadd.f32 %v795, %v781
        %v797 = vrot.slane %v796, 4
        %v798 = vadd.f32 %v796, %v797
        %v799 = vrot.slane %v798, 2
        %v800 = vadd.f32 %v798, %v799
        %v801 = vrot.slane %v800, 1
        %v802 = vadd.f32 %v800, %v801
        %v803 = vmul.f32 %v802, 0.0078125
        %v804 = vadd.f32 %v803, 1e-05
        %v805 = vrsqrt.pop %v804
        %v806 = vmul.f32 %v750, %v805
        %v807 = vmul.f32 %v751, %v805
        %v808 = vmul.f32 %v752, %v805
        %v809 = vmul.f32 %v753, %v805
        %v810 = vmul.f32 %v754, %v805
        %v811 = vmul.f32 %v755, %v805
        %v812 = vmul.f32 %v756, %v805
        %v813 = vmul.f32 %v757, %v805
        %v814 = vmul.f32 %v758, %v805
        %v815 = vmul.f32 %v759, %v805
        %v816 = vmul.f32 %v760, %v805
        %v817 = vmul.f32 %v761, %v805
        %v818 = vmul.f32 %v762, %v805
        %v819 = vmul.f32 %v763, %v805
        %v820 = vmul.f32 %v764, %v805
        %v821 = vmul.f32 %v765, %v805
        %v822 = vmul.f32 %v806, %v474
        %v823 = vmul.f32 %v807, %v479
        %v824 = vmul.f32 %v808, %v484
        %v825 = vmul.f32 %v809, %v489
        %v826 = vmul.f32 %v810, %v494
        %v827 = vmul.f32 %v811, %v499
        %v828 = vmul.f32 %v812, %v504
        %v829 = vmul.f32 %v813, %v509
        %v830 = vmul.f32 %v814, %v514
        %v831 = vmul.f32 %v815, %v519
        %v832 = vmul.f32 %v816, %v524
        %v833 = vmul.f32 %v817, %v529
        %v834 = vmul.f32 %v818, %v534
        %v835 = vmul.f32 %v819, %v539
        %v836 = vmul.f32 %v820, %v544
        %v837 = vmul.f32 %v821, %v549
        %v838 = vadd.f32 %v822, %v570
        %v839 = vadd.f32 %v823, %v575
        %v840 = vadd.f32 %v824, %v580
        %v841 = vadd.f32 %v825, %v585
        %v842 = vadd.f32 %v826, %v590
        %v843 = vadd.f32 %v827, %v595
        %v844 = vadd.f32 %v828, %v600
        %v845 = vadd.f32 %v829, %v605
        %v846 = vadd.f32 %v830, %v610
        %v847 = vadd.f32 %v831, %v615
        %v848 = vadd.f32 %v832, %v620
        %v849 = vadd.f32 %v833, %v625
        %v850 = vadd.f32 %v834, %v630
        %v851 = vadd.f32 %v835, %v635
        %v852 = vadd.f32 %v836, %v640
        %v853 = vadd.f32 %v837, %v645
        %854 = vxpose.xlu0.b32.start [1/16] %v838, 128
        %855 = vxpose.xlu0.b32.cont [2/16] %v839, 128
        %856 = vxpose.xlu0.b32.cont [3/16] %v840, 128
        %857 = vxpose.xlu0.b32.cont [4/16] %v841, 128
        %858 = vxpose.xlu0.b32.cont [5/16] %v842, 128
        %859 = vxpose.xlu0.b32.cont [6/16] %v843, 128
        %860 = vxpose.xlu0.b32.cont [7/16] %v844, 128
        %861 = vxpose.xlu0.b32.cont [8/16] %v845, 128
        %862 = vxpose.xlu0.b32.cont [9/16] %v846, 128
        %863 = vxpose.xlu0.b32.cont [10/16] %v847, 128
        %864 = vxpose.xlu0.b32.cont [11/16] %v848, 128
        %865 = vxpose.xlu0.b32.cont [12/16] %v849, 128
        %866 = vxpose.xlu0.b32.cont [13/16] %v850, 128
        %867 = vxpose.xlu0.b32.cont [14/16] %v851, 128
        %868 = vxpose.xlu0.b32.cont [15/16] %v852, 128
        %869 = vxpose.xlu0.b32.end [16/16] %v853, 128
        %v870 = vpop.trf.xlu0
        %v871 = vpop.trf.xlu0
        %v872 = vpop.trf.xlu0
        %v873 = vpop.trf.xlu0
        %v874 = vpop.trf.xlu0
        %v875 = vpop.trf.xlu0
        %v876 = vpop.trf.xlu0
        %v877 = vpop.trf.xlu0
        %v878 = vpop.trf.xlu0
        %v879 = vpop.trf.xlu0
        %v880 = vpop.trf.xlu0
        %v881 = vpop.trf.xlu0
        %v882 = vpop.trf.xlu0
        %v883 = vpop.trf.xlu0
        %v884 = vpop.trf.xlu0
        %v885 = vpop.trf.xlu0
        %s886 = scalar_lea.vmem %s327, 128 [#allocation3]
        %887 = vst [vmem:[%s886] sm:$0xff] %v870
        %888 = vst [vmem:[%s886 + $0x8] sm:$0xff] %v871
        %889 = vst [vmem:[%s886 + $0x10] sm:$0xff] %v872
        %890 = vst [vmem:[%s886 + $0x18] sm:$0xff] %v873
        %891 = vst [vmem:[%s886 + $0x20] sm:$0xff] %v874
        %892 = vst [vmem:[%s886 + $0x28] sm:$0xff] %v875
        %893 = vst [vmem:[%s886 + $0x30] sm:$0xff] %v876
        %894 = vst [vmem:[%s886 + $0x38] sm:$0xff] %v877
        %895 = vst [vmem:[%s886 + $0x40] sm:$0xff] %v878
        %896 = vst [vmem:[%s886 + $0x48] sm:$0xff] %v879
        %897 = vst [vmem:[%s886 + $0x50] sm:$0xff] %v880
        %898 = vst [vmem:[%s886 + $0x58] sm:$0xff] %v881
        %899 = vst [vmem:[%s886 + $0x60] sm:$0xff] %v882
        %900 = vst [vmem:[%s886 + $0x68] sm:$0xff] %v883
        %901 = vst [vmem:[%s886 + $0x70] sm:$0xff] %v884
        %902 = vst [vmem:[%s886 + $0x78] sm:$0xff] %v885
        %s903 = sand.u32 %s93, 1
        %s904 = scalar_lea.sflag [#allocation4], %s903
        %s905 = sand.u32 %s93, 1
        %s906 = smul.addr %s905, 256
        %s907 = scalar_lea.vmem [#allocation3], %s906
        // Predicated region
        $region71: #{patch_embed_forward.1} parent=65 // pred_check
          %p908 = pneg %p103
        $region72: #{patch_embed_forward.1} parent=65 // pred_check_branch
          %910 = sbr.rel (%p908) target = $region74
        $region73: #{patch_embed_forward.1} parent=65 // pred_region
          #allocation6 [shape = 'u32[6]{0}', space=smem, size = 0x18, scoped, tag = 'DMA stride descriptor']
          %s911 = smul.u32 16, %s17
          %s913 = ssub.s32 4096, 4096
          %914 = vsyncadd %s904, %s913
          %s915 = smul.addr %s911, 128
          %s916 = scalar_lea.hbm %s3, %s915
          %s918 = sshll.u32 1, 14
          %s919 = sxor.u32 4294967295, %s918
          %s922 = sshll.u32 7, 18
          %s923 = sxor.u32 4294967295, %s922
          %s924 = sand.u32 0, %s923
          %s926 = sor.u32 %s924, 0
          %s927 = sshll.u32 %s907, 4
          %s928 = int_to_ptr.vmem [resolvable:$true] %s927
          %934 = sst [smem:[#allocation6]] 2048
          %s935 = scalar_lea.smem [#allocation6], 1
          %936 = sst [smem:[%s935]] 4096
          %s937 = scalar_lea.smem [#allocation6], 2
          %938 = sst [smem:[%s937]] 16
          %s939 = scalar_lea.smem [#allocation6], 3
          %940 = sst [smem:[%s939]] 128
          %s941 = scalar_lea.smem [#allocation6], 4
          %942 = sst [smem:[%s941]] 128
          %s943 = scalar_lea.smem [#allocation6], 5
          %944 = sst [smem:[%s943]] 8
          %946 = dma.general %s928, 4096, %s916, %s904, 131072, [#allocation6], %s926, 0
        $region74: #{patch_embed_forward.1} parent=65 // pred_fallthru
          _
      $region66: #{patch_embed_forward.1} parent=5 // pred_fallthru
        _
      %p947 = scmp.le.s32.totalorder 2, %s12
      // Predicated region
      $region75: #{patch_embed_forward.1} parent=5 // pred_check
        %p948 = pneg %p947
      $region76: #{patch_embed_forward.1} parent=5 // pred_check_branch
        %950 = sbr.rel (%p948) target = $region78
      $region77: #{patch_embed_forward.1} parent=5 // pred_region
        %s951 = ssub.s32 %s12, 2
        // Predicated region
        $region79: #{patch_embed_forward.1} parent=77 // pred_check
          %p952 = pneg %p109
        $region80: #{patch_embed_forward.1} parent=77 // pred_check_branch
          %954 = sbr.rel (%p952) target = $region82
        $region81: #{patch_embed_forward.1} parent=77 // pred_region
          %s955 = sand.u32 %s94, 1
          %s956 = scalar_lea.sflag [#allocation4], %s955
          %s957 = sand.u32 %s94, 1
          %s958 = smul.addr %s957, 256
          %s959 = scalar_lea.vmem [#allocation3], %s958
          %960 = dma.done %s956, 4096
        $region82: #{patch_embed_forward.1} parent=77 // pred_fallthru
          _
      $region78: #{patch_embed_forward.1} parent=5 // pred_fallthru
        _
    $region6: #{patch_embed_forward.1} parent=1 // loop_footer
      %s16 = sadd.s32 1, %s12
    $region7: #{patch_embed_forward.1} parent=1 // loop_footer_branch
      %11 = sbr.rel target = $region3
    $region8: #{patch_embed_forward.1} parent=1 // loop_exit
      _
    %961 = vsyncpa [#allocation4], 1
    %s962 = scalar_lea.sflag [#allocation4], 1
    %963 = vsyncpa %s962, 1

</llo_original>
